<compile_context>
chip_gen: v7x
topology: tpu7x:2x2x1
jax: 0.10.0
libtpu: 0.0.40
codegen_flags: <defaults>
</compile_context>

<pallas_src>
import jax
import jax.numpy as jnp
from jax.experimental import pallas as pl
from jax.experimental.pallas import tpu as pltpu


def _choose_tile_pix(hw, c, itemsize, max_tile=2048, vmem_budget_bytes=2 << 20):
    """Pick a spatial tile width (last/lane dim) for the (C, TILE_PIX) block.

    Returns (tile_pix, pad) where pad is extra pixels appended to H*W.
    Prefers: full H*W if it fits, else a multiple-of-128 divisor of H*W,
    else a small ragged pad (avoids full-array jnp.pad where possible).
    """
    cap = min(max_tile, max(128, vmem_budget_bytes // max(1, c * itemsize)))
    cap = max(128, (cap // 128) * 128)
    if hw <= cap:
        return hw, 0  # block == full dim -> (8,128) rule satisfied, no pad
    t = cap
    while t >= 128:
        if hw % t == 0:
            return t, 0
        t -= 128
    # Ragged fallback: small pad up to a 512-wide tile (or cap if smaller).
    t = min(cap, 512)
    return t, (-hw) % t


def _make_kernel(c, use_mxu):
    def kernel(x_ref, wq_ref, bq_ref, wk_ref, bk_ref, wv_ref, bv_ref, o_ref):
        # x_ref: (C, T) spatial-on-lanes tile; w*: (C, C); b*: (C, 1)
        x = x_ref[...].astype(jnp.float32)

        if use_mxu:
            q = jnp.dot(wq_ref[...], x, preferred_element_type=jnp.float32) + bq_ref[...]
            k = jnp.dot(wk_ref[...], x, preferred_element_type=jnp.float32) + bk_ref[...]
            v = jnp.dot(wv_ref[...], x, preferred_element_type=jnp.float32) + bv_ref[...]
        else:
            # Small-C path: unrolled VPU FMAs; avoids a tiny (C,C)@(C,T) MXU op.
            wq = wq_ref[...]
            wk = wk_ref[...]
            wv = wv_ref[...]
            q = bq_ref[...]
            k = bk_ref[...]
            v = bv_ref[...]
            for j in range(c):
                xj = x[j:j + 1, :]                  # (1, T) sublane slice
                q = q + wq[:, j:j + 1] * xj         # (C,1)*(1,T) -> (C,T)
                k = k + wk[:, j:j + 1] * xj
                v = v + wv[:, j:j + 1] * xj

        attn = q * k
        # softmax over channels == axis-0 (sublane) reduce within the tile
        m = jnp.max(attn, axis=0, keepdims=True)
        e = jnp.exp(attn - m)
        s = jnp.sum(e, axis=0, keepdims=True)
        attn = e / s

        o_ref[...] = (v * attn + x).astype(o_ref.dtype)

    return kernel


def conv_self_attention(x, wq, bq, wk, bk, wv, bv, *, max_tile_pix=2048):
    """x: (N, C, H, W) NCHW.  wq/wk/wv: (C, C) 1x1 conv weights (Cout, Cin).
       bq/bk/bv: (C,).  Returns (N, C, H, W)."""
    N, C, H, W = x.shape
    HW = H * W
    itemsize = jnp.dtype(x.dtype).itemsize

    tile, pad = _choose_tile_pix(HW, C, itemsize, max_tile=max_tile_pix)

    x3 = x.reshape(N, C, HW)                        # free reshape, no transpose
    if pad:
        # TODO(synk): ragged H*W path pads; padded pixels are computed then sliced off.
        x3 = jnp.pad(x3, ((0, 0), (0, 0), (0, pad)))
    HWp = HW + pad

    f32 = jnp.float32
    wq2 = wq.astype(f32)
    wk2 = wk.astype(f32)
    wv2 = wv.astype(f32)
    bq2 = bq.reshape(C, 1).astype(f32)
    bk2 = bk.reshape(C, 1).astype(f32)
    bv2 = bv.reshape(C, 1).astype(f32)

    grid = (N, HWp // tile)
    kernel = _make_kernel(C, use_mxu=(C >= 64))

    w_spec = pl.BlockSpec((C, C), lambda n, p: (0, 0))
    b_spec = pl.BlockSpec((C, 1), lambda n, p: (0, 0))
    x_spec = pl.BlockSpec((None, C, tile), lambda n, p: (n, 0, p))

    out3 = pl.pallas_call(
        kernel,
        out_shape=jax.ShapeDtypeStruct((N, C, HWp), x.dtype),
        grid_spec=pltpu.PrefetchScalarGridSpec(
            num_scalar_prefetch=0,
            grid=grid,
            in_specs=[x_spec, w_spec, b_spec, w_spec, b_spec, w_spec, b_spec],
            out_specs=pl.BlockSpec((None, C, tile), lambda n, p: (n, 0, p)),
        ),
        compiler_params=pltpu.CompilerParams(
            dimension_semantics=("parallel", "parallel")),
    )(x3, wq2, bq2, wk2, bk2, wv2, bv2)

    if pad:
        out3 = out3[:, :, :HW]
    return out3.reshape(N, C, H, W)


def _reference(x, wq, bq, wk, bk, wv, bv):
    """Pure-JAX reference matching the PyTorch forward."""
    q = jnp.einsum("nchw,oc->nohw", x, wq) + bq[None, :, None, None]
    k = jnp.einsum("nchw,oc->nohw", x, wk) + bk[None, :, None, None]
    v = jnp.einsum("nchw,oc->nohw", x, wv) + bv[None, :, None, None]
    attn = jax.nn.softmax(q * k, axis=1)
    return v * attn + x


if __name__ == "__main__":
    N, C, H, W = 2, 4, 16, 16

    key = jax.random.PRNGKey(0)
    k0, k1, k2, k3, k4, k5, k6 = jax.random.split(key, 7)

    x = jax.random.normal(k0, (N, C, H, W), dtype=jnp.float32)

    # PyTorch Conv2d(kernel_size=1) default init bound
    bound = 1.0 / (C ** 0.5)
    wq = jax.random.uniform(k1, (C, C), minval=-bound, maxval=bound, dtype=jnp.float32)
    bq = jax.random.uniform(k2, (C,), minval=-bound, maxval=bound, dtype=jnp.float32)
    wk = jax.random.uniform(k3, (C, C), minval=-bound, maxval=bound, dtype=jnp.float32)
    bk = jax.random.uniform(k4, (C,), minval=-bound, maxval=bound, dtype=jnp.float32)
    wv = jax.random.uniform(k5, (C, C), minval=-bound, maxval=bound, dtype=jnp.float32)
    bv = jax.random.uniform(k6, (C,), minval=-bound, maxval=bound, dtype=jnp.float32)

    out = conv_self_attention(x, wq, bq, wk, bk, wv, bv)
    out = jax.block_until_ready(out)

    ref = _reference(x, wq, bq, wk, bk, wv, bv)
    assert out.shape == (N, C, H, W), out.shape
    assert jnp.allclose(out, ref, atol=1e-4, rtol=1e-4), (
        float(jnp.max(jnp.abs(out - ref))))

    print("KERNEL_OK")
</pallas_src>

<mosaic_0001>
module attributes {stable_mosaic.version = 11 : i64} {
  func.func @kernel(%arg0: i32, %arg1: i32, %arg2: memref<1x4x256xf32, #tpu.memory_space<vmem>>, %arg3: memref<4x4xf32, #tpu.memory_space<vmem>>, %arg4: memref<4x1xf32, #tpu.memory_space<vmem>>, %arg5: memref<4x4xf32, #tpu.memory_space<vmem>>, %arg6: memref<4x1xf32, #tpu.memory_space<vmem>>, %arg7: memref<4x4xf32, #tpu.memory_space<vmem>>, %arg8: memref<4x1xf32, #tpu.memory_space<vmem>>, %arg9: memref<1x4x256xf32, #tpu.memory_space<vmem>>) attributes {dimension_semantics = [#tpu.dimension_semantics<parallel>, #tpu.dimension_semantics<parallel>], iteration_bounds = array<i64: 2, 1>, scalar_prefetch = 0 : i64, scratch_operands = 0 : i64, tpu.core_type = #tpu.core_type<tc>, window_params = [{transform_indices = @transform_0, window_bounds = array<i64: 1, 4, 256>}, {pipeline_mode = #tpu.pipeline_mode<synchronous>, transform_indices = @transform_1, window_bounds = array<i64: 4, 4>}, {pipeline_mode = #tpu.pipeline_mode<synchronous>, transform_indices = @transform_2, window_bounds = array<i64: 4, 1>}, {pipeline_mode = #tpu.pipeline_mode<synchronous>, transform_indices = @transform_3, window_bounds = array<i64: 4, 4>}, {pipeline_mode = #tpu.pipeline_mode<synchronous>, transform_indices = @transform_4, window_bounds = array<i64: 4, 1>}, {pipeline_mode = #tpu.pipeline_mode<synchronous>, transform_indices = @transform_5, window_bounds = array<i64: 4, 4>}, {pipeline_mode = #tpu.pipeline_mode<synchronous>, transform_indices = @transform_6, window_bounds = array<i64: 4, 1>}, {transform_indices = @transform_7, window_bounds = array<i64: 1, 4, 256>}]} {
    %c0 = arith.constant 0 : index
    %c0_0 = arith.constant 0 : index
    %c0_1 = arith.constant 0 : index
    %0 = vector.load %arg2[%c0, %c0_0, %c0_1] : memref<1x4x256xf32, #tpu.memory_space<vmem>>, vector<1x4x256xf32>
    %1 = vector.shape_cast %0 : vector<1x4x256xf32> to vector<4x256xf32>
    %c0_2 = arith.constant 0 : index
    %c0_3 = arith.constant 0 : index
    %2 = vector.load %arg3[%c0_2, %c0_3] : memref<4x4xf32, #tpu.memory_space<vmem>>, vector<4x4xf32>
    %c0_4 = arith.constant 0 : index
    %c0_5 = arith.constant 0 : index
    %3 = vector.load %arg5[%c0_4, %c0_5] : memref<4x4xf32, #tpu.memory_space<vmem>>, vector<4x4xf32>
    %c0_6 = arith.constant 0 : index
    %c0_7 = arith.constant 0 : index
    %4 = vector.load %arg7[%c0_6, %c0_7] : memref<4x4xf32, #tpu.memory_space<vmem>>, vector<4x4xf32>
    %c0_8 = arith.constant 0 : index
    %c0_9 = arith.constant 0 : index
    %5 = vector.load %arg4[%c0_8, %c0_9] : memref<4x1xf32, #tpu.memory_space<vmem>>, vector<4x1xf32>
    %c0_10 = arith.constant 0 : index
    %c0_11 = arith.constant 0 : index
    %6 = vector.load %arg6[%c0_10, %c0_11] : memref<4x1xf32, #tpu.memory_space<vmem>>, vector<4x1xf32>
    %c0_12 = arith.constant 0 : index
    %c0_13 = arith.constant 0 : index
    %7 = vector.load %arg8[%c0_12, %c0_13] : memref<4x1xf32, #tpu.memory_space<vmem>>, vector<4x1xf32>
    %8 = vector.extract_strided_slice %1 {offsets = [0, 0], sizes = [1, 256], strides = [1, 1]} : vector<4x256xf32> to vector<1x256xf32>
    %9 = vector.extract_strided_slice %2 {offsets = [0, 0], sizes = [4, 1], strides = [1, 1]} : vector<4x4xf32> to vector<4x1xf32>
    %10 = vector.broadcast %9 : vector<4x1xf32> to vector<4x256xf32>
    %11 = vector.broadcast %8 : vector<1x256xf32> to vector<4x256xf32>
    %12 = arith.mulf %10, %11 : vector<4x256xf32>
    %13 = vector.broadcast %5 : vector<4x1xf32> to vector<4x256xf32>
    %14 = arith.addf %13, %12 : vector<4x256xf32>
    %15 = vector.extract_strided_slice %3 {offsets = [0, 0], sizes = [4, 1], strides = [1, 1]} : vector<4x4xf32> to vector<4x1xf32>
    %16 = vector.broadcast %15 : vector<4x1xf32> to vector<4x256xf32>
    %17 = vector.broadcast %8 : vector<1x256xf32> to vector<4x256xf32>
    %18 = arith.mulf %16, %17 : vector<4x256xf32>
    %19 = vector.broadcast %6 : vector<4x1xf32> to vector<4x256xf32>
    %20 = arith.addf %19, %18 : vector<4x256xf32>
    %21 = vector.extract_strided_slice %4 {offsets = [0, 0], sizes = [4, 1], strides = [1, 1]} : vector<4x4xf32> to vector<4x1xf32>
    %22 = vector.broadcast %21 : vector<4x1xf32> to vector<4x256xf32>
    %23 = vector.broadcast %8 : vector<1x256xf32> to vector<4x256xf32>
    %24 = arith.mulf %22, %23 : vector<4x256xf32>
    %25 = vector.broadcast %7 : vector<4x1xf32> to vector<4x256xf32>
    %26 = arith.addf %25, %24 : vector<4x256xf32>
    %27 = vector.extract_strided_slice %1 {offsets = [1, 0], sizes = [1, 256], strides = [1, 1]} : vector<4x256xf32> to vector<1x256xf32>
    %28 = vector.extract_strided_slice %2 {offsets = [0, 1], sizes = [4, 1], strides = [1, 1]} : vector<4x4xf32> to vector<4x1xf32>
    %29 = vector.broadcast %28 : vector<4x1xf32> to vector<4x256xf32>
    %30 = vector.broadcast %27 : vector<1x256xf32> to vector<4x256xf32>
    %31 = arith.mulf %29, %30 : vector<4x256xf32>
    %32 = arith.addf %14, %31 : vector<4x256xf32>
    %33 = vector.extract_strided_slice %3 {offsets = [0, 1], sizes = [4, 1], strides = [1, 1]} : vector<4x4xf32> to vector<4x1xf32>
    %34 = vector.broadcast %33 : vector<4x1xf32> to vector<4x256xf32>
    %35 = vector.broadcast %27 : vector<1x256xf32> to vector<4x256xf32>
    %36 = arith.mulf %34, %35 : vector<4x256xf32>
    %37 = arith.addf %20, %36 : vector<4x256xf32>
    %38 = vector.extract_strided_slice %4 {offsets = [0, 1], sizes = [4, 1], strides = [1, 1]} : vector<4x4xf32> to vector<4x1xf32>
    %39 = vector.broadcast %38 : vector<4x1xf32> to vector<4x256xf32>
    %40 = vector.broadcast %27 : vector<1x256xf32> to vector<4x256xf32>
    %41 = arith.mulf %39, %40 : vector<4x256xf32>
    %42 = arith.addf %26, %41 : vector<4x256xf32>
    %43 = vector.extract_strided_slice %1 {offsets = [2, 0], sizes = [1, 256], strides = [1, 1]} : vector<4x256xf32> to vector<1x256xf32>
    %44 = vector.extract_strided_slice %2 {offsets = [0, 2], sizes = [4, 1], strides = [1, 1]} : vector<4x4xf32> to vector<4x1xf32>
    %45 = vector.broadcast %44 : vector<4x1xf32> to vector<4x256xf32>
    %46 = vector.broadcast %43 : vector<1x256xf32> to vector<4x256xf32>
    %47 = arith.mulf %45, %46 : vector<4x256xf32>
    %48 = arith.addf %32, %47 : vector<4x256xf32>
    %49 = vector.extract_strided_slice %3 {offsets = [0, 2], sizes = [4, 1], strides = [1, 1]} : vector<4x4xf32> to vector<4x1xf32>
    %50 = vector.broadcast %49 : vector<4x1xf32> to vector<4x256xf32>
    %51 = vector.broadcast %43 : vector<1x256xf32> to vector<4x256xf32>
    %52 = arith.mulf %50, %51 : vector<4x256xf32>
    %53 = arith.addf %37, %52 : vector<4x256xf32>
    %54 = vector.extract_strided_slice %4 {offsets = [0, 2], sizes = [4, 1], strides = [1, 1]} : vector<4x4xf32> to vector<4x1xf32>
    %55 = vector.broadcast %54 : vector<4x1xf32> to vector<4x256xf32>
    %56 = vector.broadcast %43 : vector<1x256xf32> to vector<4x256xf32>
    %57 = arith.mulf %55, %56 : vector<4x256xf32>
    %58 = arith.addf %42, %57 : vector<4x256xf32>
    %59 = vector.extract_strided_slice %1 {offsets = [3, 0], sizes = [1, 256], strides = [1, 1]} : vector<4x256xf32> to vector<1x256xf32>
    %60 = vector.extract_strided_slice %2 {offsets = [0, 3], sizes = [4, 1], strides = [1, 1]} : vector<4x4xf32> to vector<4x1xf32>
    %61 = vector.broadcast %60 : vector<4x1xf32> to vector<4x256xf32>
    %62 = vector.broadcast %59 : vector<1x256xf32> to vector<4x256xf32>
    %63 = arith.mulf %61, %62 : vector<4x256xf32>
    %64 = arith.addf %48, %63 : vector<4x256xf32>
    %65 = vector.extract_strided_slice %3 {offsets = [0, 3], sizes = [4, 1], strides = [1, 1]} : vector<4x4xf32> to vector<4x1xf32>
    %66 = vector.broadcast %65 : vector<4x1xf32> to vector<4x256xf32>
    %67 = vector.broadcast %59 : vector<1x256xf32> to vector<4x256xf32>
    %68 = arith.mulf %66, %67 : vector<4x256xf32>
    %69 = arith.addf %53, %68 : vector<4x256xf32>
    %70 = vector.extract_strided_slice %4 {offsets = [0, 3], sizes = [4, 1], strides = [1, 1]} : vector<4x4xf32> to vector<4x1xf32>
    %71 = vector.broadcast %70 : vector<4x1xf32> to vector<4x256xf32>
    %72 = vector.broadcast %59 : vector<1x256xf32> to vector<4x256xf32>
    %73 = arith.mulf %71, %72 : vector<4x256xf32>
    %74 = arith.addf %58, %73 : vector<4x256xf32>
    %75 = arith.mulf %64, %69 : vector<4x256xf32>
    %cst = arith.constant dense<0xFF800000> : vector<256xf32>
    %76 = vector.multi_reduction <maximumf>, %75, %cst [0] : vector<4x256xf32> to vector<256xf32>
    %77 = vector.shape_cast %76 : vector<256xf32> to vector<1x256xf32>
    %78 = vector.broadcast %77 : vector<1x256xf32> to vector<4x256xf32>
    %79 = arith.subf %75, %78 : vector<4x256xf32>
    %80 = math.exp %79 : vector<4x256xf32>
    %cst_14 = arith.constant dense<0.000000e+00> : vector<256xf32>
    %81 = vector.multi_reduction <add>, %80, %cst_14 [0] : vector<4x256xf32> to vector<256xf32>
    %82 = vector.shape_cast %81 : vector<256xf32> to vector<1x256xf32>
    %83 = vector.broadcast %82 : vector<1x256xf32> to vector<4x256xf32>
    %84 = arith.divf %80, %83 : vector<4x256xf32>
    %85 = arith.mulf %74, %84 : vector<4x256xf32>
    %86 = arith.addf %85, %1 : vector<4x256xf32>
    %c0_15 = arith.constant 0 : index
    %c0_16 = arith.constant 0 : index
    %c0_17 = arith.constant 0 : index
    %87 = vector.load %arg9[%c0_15, %c0_16, %c0_17] : memref<1x4x256xf32, #tpu.memory_space<vmem>>, vector<1x4x256xf32>
    %88 = vector.shape_cast %87 : vector<1x4x256xf32> to vector<4x256xf32>
    %89 = vector.shape_cast %86 : vector<4x256xf32> to vector<1x4x256xf32>
    tpu.vector_store %arg9[%c0_15, %c0_16, %c0_17], %89 {strides = array<i32>} : memref<1x4x256xf32, #tpu.memory_space<vmem>>, vector<1x4x256xf32>,
    return
  }
  func.func @transform_0(%arg0: i32, %arg1: i32) -> (i32, i32, i32) {
    %c0_i32 = arith.constant 0 : i32
    %c0_i32_0 = arith.constant 0 : i32
    return %arg0, %c0_i32, %arg1 : i32, i32, i32
  }
  func.func @transform_1(%arg0: i32, %arg1: i32) -> (i32, i32) {
    %c0_i32 = arith.constant 0 : i32
    %c0_i32_0 = arith.constant 0 : i32
    %c0_i32_1 = arith.constant 0 : i32
    return %c0_i32, %c0_i32_0 : i32, i32
  }
  func.func @transform_2(%arg0: i32, %arg1: i32) -> (i32, i32) {
    %c0_i32 = arith.constant 0 : i32
    %c0_i32_0 = arith.constant 0 : i32
    %c0_i32_1 = arith.constant 0 : i32
    return %c0_i32, %c0_i32_0 : i32, i32
  }
  func.func @transform_3(%arg0: i32, %arg1: i32) -> (i32, i32) {
    %c0_i32 = arith.constant 0 : i32
    %c0_i32_0 = arith.constant 0 : i32
    %c0_i32_1 = arith.constant 0 : i32
    return %c0_i32, %c0_i32_0 : i32, i32
  }
  func.func @transform_4(%arg0: i32, %arg1: i32) -> (i32, i32) {
    %c0_i32 = arith.constant 0 : i32
    %c0_i32_0 = arith.constant 0 : i32
    %c0_i32_1 = arith.constant 0 : i32
    return %c0_i32, %c0_i32_0 : i32, i32
  }
  func.func @transform_5(%arg0: i32, %arg1: i32) -> (i32, i32) {
    %c0_i32 = arith.constant 0 : i32
    %c0_i32_0 = arith.constant 0 : i32
    %c0_i32_1 = arith.constant 0 : i32
    return %c0_i32, %c0_i32_0 : i32, i32
  }
  func.func @transform_6(%arg0: i32, %arg1: i32) -> (i32, i32) {
    %c0_i32 = arith.constant 0 : i32
    %c0_i32_0 = arith.constant 0 : i32
    %c0_i32_1 = arith.constant 0 : i32
    return %c0_i32, %c0_i32_0 : i32, i32
  }
  func.func @transform_7(%arg0: i32, %arg1: i32) -> (i32, i32, i32) {
    %c0_i32 = arith.constant 0 : i32
    %c0_i32_0 = arith.constant 0 : i32
    return %arg0, %c0_i32, %arg1 : i32, i32, i32
  }
}

</mosaic_0001>

<llo_original>
// kernel: tpu_custom_call.1
$region0: #{tpu_custom_call.1}
  #allocation0 [shape = 'u32[]', space=smem, size = 0x4, offset = 0x4, fixed_abs, tag = 'smem constant byte address 0x4 - core index']
  #allocation1 [shape = 'u32[144,128]{1,0:T(1,128)}', space=vmem, size = 0x12000, scoped, tag = 'internal scratch']
  %s0 = inlined_call_operand.hbm [shape: f32[2,4,256], index: 0, kind: input, shape index: {}]
  %s1 = inlined_call_operand.vmem [shape: f32[4,4], index: 1, kind: input, shape index: {}]
  %s2 = inlined_call_operand.vmem [shape: f32[4,1], index: 2, kind: input, shape index: {}]
  %s3 = inlined_call_operand.vmem [shape: f32[4,4], index: 3, kind: input, shape index: {}]
  %s4 = inlined_call_operand.vmem [shape: f32[4,1], index: 4, kind: input, shape index: {}]
  %s5 = inlined_call_operand.vmem [shape: f32[4,4], index: 5, kind: input, shape index: {}]
  %s6 = inlined_call_operand.vmem [shape: f32[4,1], index: 6, kind: input, shape index: {}]
  %s7 = inlined_call_operand.hbm [shape: f32[2,4,256], index: 7, kind: output, shape index: {}]
  %s8 = sld [smem:[#allocation0]]
  $region65: #{tpu_custom_call.1} parent=0
    _
  %s10 = ssub.s32 1, %s8
  %s11 = scalar_select 0, %s10, %s8
  $region1: #{tpu_custom_call.1} parent=0
    #allocation2 [shape = 'u8[8192]{0}', space=vmem, size = 0x2000, scoped, tag = 'input window, operand 0']
    #allocation3 [shape = 's32[2]{0}', space=sflag, size = 0x8, scoped, tag = 'scoped memory for tpu_custom_call.1']
    #allocation4 [shape = 's32[2]{0}', space=sflag, size = 0x8, scoped, tag = 'scoped memory for tpu_custom_call.1']
    #allocation5 [shape = 'u8[8192]{0}', space=vmem, size = 0x2000, scoped, tag = 'output window, operand 0']
    %12 = vsyncpa [#allocation3], 0
    %s13 = scalar_lea.sflag [#allocation3], 1
    %14 = vsyncpa %s13, 0
    %15 = vsyncpa [#allocation4], 0
    %s16 = scalar_lea.sflag [#allocation4], 1
    %17 = vsyncpa %s16, 0
    loop: start=0, step=1, limit=4
    $region2: #{tpu_custom_call.1} parent=1 // loop_pre_header
      _
    $region3: #{tpu_custom_call.1} parent=1 // loop_header
      %s19 = sphi 0, %s23
      %p20 = scmp.ge.s32.totalorder %s19, 4
      %s26 = sphi 0, %s38
      %s27 = sphi 0, %s34
      %s28 = sphi 0, %s26
      %s29 = sphi 0, %s27
      %s30 = sphi 0, %s28
      %s31 = sphi 0, %s29
      %s43 = sphi 0, %s45
      %s46 = sphi 0, %s43
      %s47 = sphi 0, %s46
      %s63 = sphi 0, %s47
      %s67 = sphi 0, %s67
      %s69 = sphi 0, %s67
      %s70 = sphi 0, %s69
      %s84 = sphi 0, %s70
      %s88 = sphi 0, %s88
      %s90 = sphi 0, %s88
      %s91 = sphi 0, %s90
      %s105 = sphi 0, %s91
      %s109 = sphi 0, %s109
      %s111 = sphi 0, %s109
      %s112 = sphi 0, %s111
      %s126 = sphi 0, %s112
      %s130 = sphi 0, %s130
      %s132 = sphi 0, %s130
      %s133 = sphi 0, %s132
      %s147 = sphi 0, %s133
      %s151 = sphi 0, %s151
      %s153 = sphi 0, %s151
      %s154 = sphi 0, %s153
      %s168 = sphi 0, %s154
      %s172 = sphi 0, %s172
      %s174 = sphi 0, %s172
      %s175 = sphi 0, %s174
      %s189 = sphi 0, %s175
      %s197 = sphi 0, %s199
      %s200 = sphi 0, %s197
      %s201 = sphi 0, %s200
      %s217 = sphi 0, %s201
    $region4: #{tpu_custom_call.1} parent=1 // loop_header_branch
      %22 = sbr.rel (%p20) target = $region8
    $region5: #{tpu_custom_call.1} parent=1 // loop_body
      %s24 = ssub.s32 %s19, 1
      %s25 = ssub.s32 %s19, 2
      %s32 = sadd.s32 1, %s27
      %p33 = scmp.ge.s32.totalorder %s32, 1
      %s34 = scalar_select %p33, 0, %s32
      %s35 = sadd.s32 1, %s26
      %s36 = scalar_select %p33, %s35, %s26
      %p37 = scmp.ge.s32.totalorder %s36, 2
      %s38 = scalar_select %p37, 0, %s36
      %s39 = ssub.s32 %s26, %s38
      %s40 = ssub.s32 %s27, %s34
      %s41 = sor.u32 %s39, %s40
      %p42 = scmp.eq.s32.totalorder %s41, 0
      %s44 = sadd.s32 %s43, 1
      %s45 = scalar_select %p42, %s43, %s44
      %p48 = pneg %p42
      %p49 = scmp.eq.s32.totalorder %s19, 1
      %p50 = por %p48, %p49
      %p51 = scmp.ne.s32.totalorder %s43, %s46
      %p52 = scmp.eq.s32.totalorder %s19, 0
      %p53 = por %p51, %p52
      %p54 = scmp.ne.s32.totalorder %s43, %s46
      %p55 = scmp.eq.s32.totalorder %s24, 1
      %p56 = por %p54, %p55
      %p57 = scmp.ne.s32.totalorder %s46, %s47
      %p58 = scmp.eq.s32.totalorder %s24, 0
      %p59 = por %p57, %p58
      %p60 = scmp.ne.s32.totalorder %s46, %s47
      %p61 = scmp.eq.s32.totalorder %s25, 1
      %p62 = por %p60, %p61
      %p64 = scmp.ne.s32.totalorder %s47, %s63
      %p65 = scmp.eq.s32.totalorder %s25, 0
      %p66 = por %p64, %p65
      %s68 = sadd.s32 %s67, 1
      %p71 = scmp.eq.s32.totalorder %s19, 1
      %p72 = scmp.ne.s32.totalorder %s67, %s69
      %p73 = scmp.eq.s32.totalorder %s19, 0
      %p74 = por %p72, %p73
      %p75 = scmp.ne.s32.totalorder %s67, %s69
      %p76 = scmp.eq.s32.totalorder %s24, 1
      %p77 = por %p75, %p76
      %p78 = scmp.ne.s32.totalorder %s69, %s70
      %p79 = scmp.eq.s32.totalorder %s24, 0
      %p80 = por %p78, %p79
      %p81 = scmp.ne.s32.totalorder %s69, %s70
      %p82 = scmp.eq.s32.totalorder %s25, 1
      %p83 = por %p81, %p82
      %p85 = scmp.ne.s32.totalorder %s70, %s84
      %p86 = scmp.eq.s32.totalorder %s25, 0
      %p87 = por %p85, %p86
      %s89 = sadd.s32 %s88, 1
      %p92 = scmp.eq.s32.totalorder %s19, 1
      %p93 = scmp.ne.s32.totalorder %s88, %s90
      %p94 = scmp.eq.s32.totalorder %s19, 0
      %p95 = por %p93, %p94
      %p96 = scmp.ne.s32.totalorder %s88, %s90
      %p97 = scmp.eq.s32.totalorder %s24, 1
      %p98 = por %p96, %p97
      %p99 = scmp.ne.s32.totalorder %s90, %s91
      %p100 = scmp.eq.s32.totalorder %s24, 0
      %p101 = por %p99, %p100
      %p102 = scmp.ne.s32.totalorder %s90, %s91
      %p103 = scmp.eq.s32.totalorder %s25, 1
      %p104 = por %p102, %p103
      %p106 = scmp.ne.s32.totalorder %s91, %s105
      %p107 = scmp.eq.s32.totalorder %s25, 0
      %p108 = por %p106, %p107
      %s110 = sadd.s32 %s109, 1
      %p113 = scmp.eq.s32.totalorder %s19, 1
      %p114 = scmp.ne.s32.totalorder %s109, %s111
      %p115 = scmp.eq.s32.totalorder %s19, 0
      %p116 = por %p114, %p115
      %p117 = scmp.ne.s32.totalorder %s109, %s111
      %p118 = scmp.eq.s32.totalorder %s24, 1
      %p119 = por %p117, %p118
      %p120 = scmp.ne.s32.totalorder %s111, %s112
      %p121 = scmp.eq.s32.totalorder %s24, 0
      %p122 = por %p120, %p121
      %p123 = scmp.ne.s32.totalorder %s111, %s112
      %p124 = scmp.eq.s32.totalorder %s25, 1
      %p125 = por %p123, %p124
      %p127 = scmp.ne.s32.totalorder %s112, %s126
      %p128 = scmp.eq.s32.totalorder %s25, 0
      %p129 = por %p127, %p128
      %s131 = sadd.s32 %s130, 1
      %p134 = scmp.eq.s32.totalorder %s19, 1
      %p135 = scmp.ne.s32.totalorder %s130, %s132
      %p136 = scmp.eq.s32.totalorder %s19, 0
      %p137 = por %p135, %p136
      %p138 = scmp.ne.s32.totalorder %s130, %s132
      %p139 = scmp.eq.s32.totalorder %s24, 1
      %p140 = por %p138, %p139
      %p141 = scmp.ne.s32.totalorder %s132, %s133
      %p142 = scmp.eq.s32.totalorder %s24, 0
      %p143 = por %p141, %p142
      %p144 = scmp.ne.s32.totalorder %s132, %s133
      %p145 = scmp.eq.s32.totalorder %s25, 1
      %p146 = por %p144, %p145
      %p148 = scmp.ne.s32.totalorder %s133, %s147
      %p149 = scmp.eq.s32.totalorder %s25, 0
      %p150 = por %p148, %p149
      %s152 = sadd.s32 %s151, 1
      %p155 = scmp.eq.s32.totalorder %s19, 1
      %p156 = scmp.ne.s32.totalorder %s151, %s153
      %p157 = scmp.eq.s32.totalorder %s19, 0
      %p158 = por %p156, %p157
      %p159 = scmp.ne.s32.totalorder %s151, %s153
      %p160 = scmp.eq.s32.totalorder %s24, 1
      %p161 = por %p159, %p160
      %p162 = scmp.ne.s32.totalorder %s153, %s154
      %p163 = scmp.eq.s32.totalorder %s24, 0
      %p164 = por %p162, %p163
      %p165 = scmp.ne.s32.totalorder %s153, %s154
      %p166 = scmp.eq.s32.totalorder %s25, 1
      %p167 = por %p165, %p166
      %p169 = scmp.ne.s32.totalorder %s154, %s168
      %p170 = scmp.eq.s32.totalorder %s25, 0
      %p171 = por %p169, %p170
      %s173 = sadd.s32 %s172, 1
      %p176 = scmp.eq.s32.totalorder %s19, 1
      %p177 = scmp.ne.s32.totalorder %s172, %s174
      %p178 = scmp.eq.s32.totalorder %s19, 0
      %p179 = por %p177, %p178
      %p180 = scmp.ne.s32.totalorder %s172, %s174
      %p181 = scmp.eq.s32.totalorder %s24, 1
      %p182 = por %p180, %p181
      %p183 = scmp.ne.s32.totalorder %s174, %s175
      %p184 = scmp.eq.s32.totalorder %s24, 0
      %p185 = por %p183, %p184
      %p186 = scmp.ne.s32.totalorder %s174, %s175
      %p187 = scmp.eq.s32.totalorder %s25, 1
      %p188 = por %p186, %p187
      %p190 = scmp.ne.s32.totalorder %s175, %s189
      %p191 = scmp.eq.s32.totalorder %s25, 0
      %p192 = por %p190, %p191
      %s193 = ssub.s32 %s26, %s38
      %s194 = ssub.s32 %s27, %s34
      %s195 = sor.u32 %s193, %s194
      %p196 = scmp.eq.s32.totalorder %s195, 0
      %s198 = sadd.s32 %s197, 1
      %s199 = scalar_select %p196, %s197, %s198
      %p202 = pneg %p196
      %p203 = scmp.eq.s32.totalorder %s19, 1
      %p204 = por %p202, %p203
      %p205 = scmp.ne.s32.totalorder %s197, %s200
      %p206 = scmp.eq.s32.totalorder %s19, 0
      %p207 = por %p205, %p206
      %p208 = scmp.ne.s32.totalorder %s197, %s200
      %p209 = scmp.eq.s32.totalorder %s24, 1
      %p210 = por %p208, %p209
      %p211 = scmp.ne.s32.totalorder %s200, %s201
      %p212 = scmp.eq.s32.totalorder %s24, 0
      %p213 = por %p211, %p212
      %p214 = scmp.ne.s32.totalorder %s200, %s201
      %p215 = scmp.eq.s32.totalorder %s25, 1
      %p216 = por %p214, %p215
      %p218 = scmp.ne.s32.totalorder %s201, %s217
      %p219 = scmp.eq.s32.totalorder %s25, 0
      %p220 = por %p218, %p219
      %p221 = scmp.le.s32.totalorder 1, %s19
      %p222 = scmp.lt.s32.totalorder %s19, 3
      %p223 = pnand %p221, %p222
      %p224 = pneg %p223
      // Predicated region
      $region9: #{tpu_custom_call.1} parent=5 // pred_check
        _
      $region10: #{tpu_custom_call.1} parent=5 // pred_check_branch
        %226 = sbr.rel (%p223) target = $region12
      $region11: #{tpu_custom_call.1} parent=5 // pred_region
        %s227 = ssub.s32 %s19, 1
        // Predicated region
        $region13: #{tpu_custom_call.1} parent=11 // pred_check
          %p228 = pneg %p80
        $region14: #{tpu_custom_call.1} parent=11 // pred_check_branch
          %230 = sbr.rel (%p228) target = $region16
        $region15: #{tpu_custom_call.1} parent=11 // pred_region
          _
        $region16: #{tpu_custom_call.1} parent=11 // pred_fallthru
          _
        // Predicated region
        $region17: #{tpu_custom_call.1} parent=11 // pred_check
          %p231 = pneg %p101
        $region18: #{tpu_custom_call.1} parent=11 // pred_check_branch
          %233 = sbr.rel (%p231) target = $region20
        $region19: #{tpu_custom_call.1} parent=11 // pred_region
          _
        $region20: #{tpu_custom_call.1} parent=11 // pred_fallthru
          _
        // Predicated region
        $region21: #{tpu_custom_call.1} parent=11 // pred_check
          %p234 = pneg %p122
        $region22: #{tpu_custom_call.1} parent=11 // pred_check_branch
          %236 = sbr.rel (%p234) target = $region24
        $region23: #{tpu_custom_call.1} parent=11 // pred_region
          _
        $region24: #{tpu_custom_call.1} parent=11 // pred_fallthru
          _
        // Predicated region
        $region25: #{tpu_custom_call.1} parent=11 // pred_check
          %p237 = pneg %p143
        $region26: #{tpu_custom_call.1} parent=11 // pred_check_branch
          %239 = sbr.rel (%p237) target = $region28
        $region27: #{tpu_custom_call.1} parent=11 // pred_region
          _
        $region28: #{tpu_custom_call.1} parent=11 // pred_fallthru
          _
        // Predicated region
        $region29: #{tpu_custom_call.1} parent=11 // pred_check
          %p240 = pneg %p164
        $region30: #{tpu_custom_call.1} parent=11 // pred_check_branch
          %242 = sbr.rel (%p240) target = $region32
        $region31: #{tpu_custom_call.1} parent=11 // pred_region
          _
        $region32: #{tpu_custom_call.1} parent=11 // pred_fallthru
          _
        // Predicated region
        $region33: #{tpu_custom_call.1} parent=11 // pred_check
          %p243 = pneg %p185
        $region34: #{tpu_custom_call.1} parent=11 // pred_check_branch
          %245 = sbr.rel (%p243) target = $region36
        $region35: #{tpu_custom_call.1} parent=11 // pred_region
          _
        $region36: #{tpu_custom_call.1} parent=11 // pred_fallthru
          _
      $region12: #{tpu_custom_call.1} parent=5 // pred_fallthru
        _
      %p246 = scmp.lt.s32.totalorder %s19, 2
      // Predicated region
      $region37: #{tpu_custom_call.1} parent=5 // pred_check
        %p247 = pneg %p246
      $region38: #{tpu_custom_call.1} parent=5 // pred_check_branch
        %249 = sbr.rel (%p247) target = $region40
      $region39: #{tpu_custom_call.1} parent=5 // pred_region
        // Predicated region
        $region41: #{tpu_custom_call.1} parent=39 // pred_check
          %p250 = pneg %p53
        $region42: #{tpu_custom_call.1} parent=39 // pred_check_branch
          %252 = sbr.rel (%p250) target = $region44
        $region43: #{tpu_custom_call.1} parent=39 // pred_region
          %s253 = sand.u32 %s43, 1
          %s254 = scalar_lea.sflag [#allocation3], %s253
          %s255 = sand.u32 %s43, 1
          %s256 = smul.addr %s255, 8
          %s257 = scalar_lea.vmem [#allocation2], %s256
          %s258 = smul.u32 2, %s27
          %s260 = ssub.s32 128, 128
          %261 = vsyncadd %s254, %s260
          %s262 = smul.addr %s26, 2
          %s263 = sadd.s32 %s258, %s262
          %s264 = smul.addr %s263, 64
          %s265 = scalar_lea.hbm %s0, %s264
          %s267 = sshll.u32 %s257, 4
          %s268 = int_to_ptr.vmem [resolvable:$true] %s267
          %270 = dma.hbm_to_vmem [thread:$0]  %s265, 128, %s268, %s254
        $region44: #{tpu_custom_call.1} parent=39 // pred_fallthru
          _
      $region40: #{tpu_custom_call.1} parent=5 // pred_fallthru
        _
      %p271 = scmp.le.s32.totalorder 1, %s19
      %p272 = scmp.lt.s32.totalorder %s19, 3
      %p273 = pnand %p271, %p272
      %p274 = pneg %p273
      // Predicated region
      $region45: #{tpu_custom_call.1} parent=5 // pred_check
        _
      $region46: #{tpu_custom_call.1} parent=5 // pred_check_branch
        %276 = sbr.rel (%p273) target = $region48
      $region47: #{tpu_custom_call.1} parent=5 // pred_region
        %s277 = ssub.s32 %s19, 1
        %s278 = sand.u32 %s46, 1
        %s279 = scalar_lea.sflag [#allocation3], %s278
        %s280 = sand.u32 %s46, 1
        %s281 = smul.addr %s280, 8
        %s282 = scalar_lea.vmem [#allocation2], %s281
        // Predicated region
        $region49: #{tpu_custom_call.1} parent=47 // pred_check
          %p283 = pneg %p59
        $region50: #{tpu_custom_call.1} parent=47 // pred_check_branch
          %285 = sbr.rel (%p283) target = $region52
        $region51: #{tpu_custom_call.1} parent=47 // pred_region
          %286 = dma.done %s279, 128
        $region52: #{tpu_custom_call.1} parent=47 // pred_fallthru
          _
        %s287 = sand.u32 %s46, 1
        %s288 = scalar_lea.sflag [#allocation3], %s287
        %s289 = sand.u32 %s46, 1
        %s290 = smul.addr %s289, 8
        %s291 = scalar_lea.vmem [#allocation2], %s290
        %p292 = pneg %p59
        %p293 = pneg %p56
        %p294 = pneg %p80
        %p295 = pneg %p77
        %p296 = pneg %p101
        %p297 = pneg %p98
        %p298 = pneg %p122
        %p299 = pneg %p119
        %p300 = pneg %p143
        %p301 = pneg %p140
        %p302 = pneg %p164
        %p303 = pneg %p161
        %p304 = pneg %p185
        %p305 = pneg %p182
        %p306 = pneg %p213
        %p307 = pneg %p210
        %s308 = sand.u32 %s200, 1
        %s309 = scalar_lea.sflag [#allocation4], %s308
        %s310 = sand.u32 %s200, 1
        %s311 = smul.addr %s310, 8
        %s312 = scalar_lea.vmem [#allocation5], %s311
        %s313 = smul.u32 2, %s29
        %s314 = smul.u32 2, %s29
        %v315 = vld [vmem:[%s282] sm:$0xff]
        %v316 = vld [vmem:[%s1] sm:$0xf]
        %v317 = vld [vmem:[%s3] sm:$0xf]
        %v318 = vld [vmem:[%s5] sm:$0xf]
        %v319 = vld [vmem:[%s2] sm:$0xf]
        %v320 = vld [vmem:[%s4] sm:$0xf]
        %v321 = vld [vmem:[%s6] sm:$0xf]
        %323 = vset.pattern.permute.xlu0 0
        %324 = vperm.xlu0 %323, %v316
        %v325 = vpop.permute.xlu0 %324
        %v328 = vlaneseq
        %v329 = vshrl.u32 %v328, 7
        %v330 = vsub.s32 0, %v329
        %v331 = vrot.slane %v315, %v330
        %v332 = vlaneseq
        %v333 = vshrl.u32 %v332, 7
        %v334 = vsub.s32 4, %v333
        %v335 = vrot.slane %v315, %v334
        %v338 = vlaneseq
        %v339 = vshrl.u32 %v338, 7
        %v340 = vsub.s32 0, %v339
        %v341 = vrot.slane %v331, %v340
        %v342 = vlaneseq
        %v343 = vshrl.u32 %v342, 7
        %v344 = vsub.s32 0, %v343
        %v345 = vrot.slane %v335, %v344
        %v346 = vmul.f32 %v325, %v341
        %v347 = vmul.f32 %v325, %v345
        %349 = vset.pattern.permute.xlu0 0
        %350 = vperm.xlu0 %349, %v319
        %v351 = vpop.permute.xlu0 %350
        %v353 = vadd.f32 %v351, %v346
        %v354 = vadd.f32 %v351, %v347
        %356 = vset.pattern.permute.xlu0 0
        %357 = vperm.xlu0 %356, %v317
        %v358 = vpop.permute.xlu0 %357
        %v360 = vmul.f32 %v358, %v341
        %v361 = vmul.f32 %v358, %v345
        %363 = vset.pattern.permute.xlu0 0
        %364 = vperm.xlu0 %363, %v320
        %v365 = vpop.permute.xlu0 %364
        %v367 = vadd.f32 %v365, %v360
        %v368 = vadd.f32 %v365, %v361
        %370 = vset.pattern.permute.xlu0 0
        %371 = vperm.xlu0 %370, %v318
        %v372 = vpop.permute.xlu0 %371
        %v374 = vmul.f32 %v372, %v341
        %v375 = vmul.f32 %v372, %v345
        %377 = vset.pattern.permute.xlu0 0
        %378 = vperm.xlu0 %377, %v321
        %v379 = vpop.permute.xlu0 %378
        %v381 = vadd.f32 %v379, %v374
        %v382 = vadd.f32 %v379, %v375
        %383 = vset.pattern.permute.xlu0 1
        %384 = vperm.xlu0 %383, %v316
        %v385 = vpop.permute.xlu0 %384
        %v387 = vlaneseq
        %v388 = vshrl.u32 %v387, 7
        %v389 = vsub.s32 1, %v388
        %v390 = vrot.slane %v315, %v389
        %v391 = vlaneseq
        %v392 = vshrl.u32 %v391, 7
        %v393 = vsub.s32 5, %v392
        %v394 = vrot.slane %v315, %v393
        %v397 = vlaneseq
        %v398 = vshrl.u32 %v397, 7
        %v399 = vsub.s32 1, %v398
        %v400 = vrot.slane %v390, %v399
        %v401 = vlaneseq
        %v402 = vshrl.u32 %v401, 7
        %v403 = vsub.s32 1, %v402
        %v404 = vrot.slane %v394, %v403
        %v405 = vmul.f32 %v385, %v400
        %v406 = vmul.f32 %v385, %v404
        %v407 = vadd.f32 %v353, %v405
        %v408 = vadd.f32 %v354, %v406
        %409 = vset.pattern.permute.xlu0 1
        %410 = vperm.xlu0 %409, %v317
        %v411 = vpop.permute.xlu0 %410
        %v413 = vmul.f32 %v411, %v400
        %v414 = vmul.f32 %v411, %v404
        %v415 = vadd.f32 %v367, %v413
        %v416 = vadd.f32 %v368, %v414
        %417 = vset.pattern.permute.xlu0 1
        %418 = vperm.xlu0 %417, %v318
        %v419 = vpop.permute.xlu0 %418
        %v421 = vmul.f32 %v419, %v400
        %v422 = vmul.f32 %v419, %v404
        %v423 = vadd.f32 %v381, %v421
        %v424 = vadd.f32 %v382, %v422
        %425 = vset.pattern.permute.xlu0 2
        %426 = vperm.xlu0 %425, %v316
        %v427 = vpop.permute.xlu0 %426
        %v429 = vlaneseq
        %v430 = vshrl.u32 %v429, 7
        %v431 = vsub.s32 2, %v430
        %v432 = vrot.slane %v315, %v431
        %v433 = vlaneseq
        %v434 = vshrl.u32 %v433, 7
        %v435 = vsub.s32 6, %v434
        %v436 = vrot.slane %v315, %v435
        %v439 = vlaneseq
        %v440 = vshrl.u32 %v439, 7
        %v441 = vsub.s32 2, %v440
        %v442 = vrot.slane %v432, %v441
        %v443 = vlaneseq
        %v444 = vshrl.u32 %v443, 7
        %v445 = vsub.s32 2, %v444
        %v446 = vrot.slane %v436, %v445
        %v447 = vmul.f32 %v427, %v442
        %v448 = vmul.f32 %v427, %v446
        %v449 = vadd.f32 %v407, %v447
        %v450 = vadd.f32 %v408, %v448
        %451 = vset.pattern.permute.xlu0 2
        %452 = vperm.xlu0 %451, %v317
        %v453 = vpop.permute.xlu0 %452
        %v455 = vmul.f32 %v453, %v442
        %v456 = vmul.f32 %v453, %v446
        %v457 = vadd.f32 %v415, %v455
        %v458 = vadd.f32 %v416, %v456
        %459 = vset.pattern.permute.xlu0 2
        %460 = vperm.xlu0 %459, %v318
        %v461 = vpop.permute.xlu0 %460
        %v463 = vmul.f32 %v461, %v442
        %v464 = vmul.f32 %v461, %v446
        %v465 = vadd.f32 %v423, %v463
        %v466 = vadd.f32 %v424, %v464
        %467 = vset.pattern.permute.xlu0 3
        %468 = vperm.xlu0 %467, %v316
        %v469 = vpop.permute.xlu0 %468
        %v471 = vlaneseq
        %v472 = vshrl.u32 %v471, 7
        %v473 = vsub.s32 3, %v472
        %v474 = vrot.slane %v315, %v473
        %v475 = vlaneseq
        %v476 = vshrl.u32 %v475, 7
        %v477 = vsub.s32 7, %v476
        %v478 = vrot.slane %v315, %v477
        %v481 = vlaneseq
        %v482 = vshrl.u32 %v481, 7
        %v483 = vsub.s32 3, %v482
        %v484 = vrot.slane %v474, %v483
        %v485 = vlaneseq
        %v486 = vshrl.u32 %v485, 7
        %v487 = vsub.s32 3, %v486
        %v488 = vrot.slane %v478, %v487
        %v489 = vmul.f32 %v469, %v484
        %v490 = vmul.f32 %v469, %v488
        %v491 = vadd.f32 %v449, %v489
        %v492 = vadd.f32 %v450, %v490
        %493 = vset.pattern.permute.xlu0 3
        %494 = vperm.xlu0 %493, %v317
        %v495 = vpop.permute.xlu0 %494
        %v497 = vmul.f32 %v495, %v484
        %v498 = vmul.f32 %v495, %v488
        %v499 = vadd.f32 %v457, %v497
        %v500 = vadd.f32 %v458, %v498
        %501 = vset.pattern.permute.xlu0 3
        %502 = vperm.xlu0 %501, %v318
        %v503 = vpop.permute.xlu0 %502
        %v505 = vmul.f32 %v503, %v484
        %v506 = vmul.f32 %v503, %v488
        %v507 = vadd.f32 %v465, %v505
        %v508 = vadd.f32 %v466, %v506
        %v509 = vmul.f32 %v491, %v499
        %v510 = vmul.f32 %v492, %v500
        %vm511 = vcmask 1043456
        %v512 = vsel %vm511, %v509, -inf
        %v513 = vrot.slane %v512, 4
        %v514 = vmax.f32 %v512, %v513
        %v515 = vrot.slane %v514, 2
        %v516 = vmax.f32 %v514, %v515
        %v517 = vrot.slane %v516, 1
        %v518 = vmax.f32 %v516, %v517
        %v519 = vsel %vm511, %v510, -inf
        %v520 = vrot.slane %v519, 4
        %v521 = vmax.f32 %v519, %v520
        %v522 = vrot.slane %v521, 2
        %v523 = vmax.f32 %v521, %v522
        %v524 = vrot.slane %v523, 1
        %v525 = vmax.f32 %v523, %v524
        %v526 = vsub.f32 %v509, %v518
        %v527 = vsub.f32 %v510, %v525
        %v528 = vmul.f32 %v526, 1.442695
        %v529 = vpow.pop %v528
        %v530 = vmul.f32 %v527, 1.442695
        %v531 = vpow.pop %v530
        %v532 = vsel %vm511, %v529, 0.0
        %v533 = vrot.slane %v532, 4
        %v534 = vadd.f32 %v532, %v533
        %v535 = vrot.slane %v534, 2
        %v536 = vadd.f32 %v534, %v535
        %v537 = vrot.slane %v536, 1
        %v538 = vadd.f32 %v536, %v537
        %v539 = vsel %vm511, %v531, 0.0
        %v540 = vrot.slane %v539, 4
        %v541 = vadd.f32 %v539, %v540
        %v542 = vrot.slane %v541, 2
        %v543 = vadd.f32 %v541, %v542
        %v544 = vrot.slane %v543, 1
        %v545 = vadd.f32 %v543, %v544
        %v546 = vrcp.pop %v538
        %v547 = vmul.f32 %v529, %v546
        %v548 = vrcp.pop %v545
        %v549 = vmul.f32 %v531, %v548
        %v550 = vmul.f32 %v507, %v547
        %v551 = vmul.f32 %v508, %v549
        %v552 = vcombine.high %v315, %v315
        %v554 = vadd.f32 %v550, %v315
        %v555 = vadd.f32 %v551, %v552
        %v558 = vcombine.low %v554, %v555
        %560 = vst [vmem:[%s312] sm:$0xff] %v558
        %s561 = sand.u32 %s200, 1
        %s562 = scalar_lea.sflag [#allocation4], %s561
        %s563 = sand.u32 %s200, 1
        %s564 = smul.addr %s563, 8
        %s565 = scalar_lea.vmem [#allocation5], %s564
        // Predicated region
        $region53: #{tpu_custom_call.1} parent=47 // pred_check
          %p566 = pneg %p210
        $region54: #{tpu_custom_call.1} parent=47 // pred_check_branch
          %568 = sbr.rel (%p566) target = $region56
        $region55: #{tpu_custom_call.1} parent=47 // pred_region
          %s569 = smul.u32 2, %s29
          %s571 = ssub.s32 128, 128
          %572 = vsyncadd %s562, %s571
          %s573 = smul.addr %s28, 2
          %s574 = sadd.s32 %s569, %s573
          %s575 = smul.addr %s574, 64
          %s576 = scalar_lea.hbm %s7, %s575
          %s578 = sshll.u32 %s565, 4
          %s579 = int_to_ptr.vmem [resolvable:$true] %s578
          %581 = dma.vmem_to_hbm [thread:$0]  %s579, 128, %s576, %s562
        $region56: #{tpu_custom_call.1} parent=47 // pred_fallthru
          _
      $region48: #{tpu_custom_call.1} parent=5 // pred_fallthru
        _
      %p582 = scmp.le.s32.totalorder 2, %s19
      // Predicated region
      $region57: #{tpu_custom_call.1} parent=5 // pred_check
        %p583 = pneg %p582
      $region58: #{tpu_custom_call.1} parent=5 // pred_check_branch
        %585 = sbr.rel (%p583) target = $region60
      $region59: #{tpu_custom_call.1} parent=5 // pred_region
        %s586 = ssub.s32 %s19, 2
        // Predicated region
        $region61: #{tpu_custom_call.1} parent=59 // pred_check
          %p587 = pneg %p216
        $region62: #{tpu_custom_call.1} parent=59 // pred_check_branch
          %589 = sbr.rel (%p587) target = $region64
        $region63: #{tpu_custom_call.1} parent=59 // pred_region
          %s590 = sand.u32 %s201, 1
          %s591 = scalar_lea.sflag [#allocation4], %s590
          %s592 = sand.u32 %s201, 1
          %s593 = smul.addr %s592, 8
          %s594 = scalar_lea.vmem [#allocation5], %s593
          %595 = dma.done %s591, 128
        $region64: #{tpu_custom_call.1} parent=59 // pred_fallthru
          _
      $region60: #{tpu_custom_call.1} parent=5 // pred_fallthru
        _
    $region6: #{tpu_custom_call.1} parent=1 // loop_footer
      %s23 = sadd.s32 1, %s19
    $region7: #{tpu_custom_call.1} parent=1 // loop_footer_branch
      %18 = sbr.rel target = $region3
    $region8: #{tpu_custom_call.1} parent=1 // loop_exit
      _
    %596 = vsyncpa [#allocation3], 1
    %s597 = scalar_lea.sflag [#allocation3], 1
    %598 = vsyncpa %s597, 1
    %599 = vsyncpa [#allocation4], 1
    %s600 = scalar_lea.sflag [#allocation4], 1
    %601 = vsyncpa %s600, 1

</llo_original>
